<compile_context>
chip_gen: v7x
topology: tpu7x:2x2x1
jax: 0.10.0
libtpu: 0.0.40
codegen_flags: <defaults>
</compile_context>

<pallas_src>
import jax
import jax.numpy as jnp
from jax import lax
from jax.experimental import pallas as pl
from jax.experimental.pallas import tpu as pltpu
import numpy as np

LANE = 128


def make_mpc_kernel(T, rows, num_steps, lr, dt, wp, wv, wa):
    """Builds the Pallas kernel body (all hyper-params are static Python consts)."""
    lr2wp = lr * 2.0 * wp          # lr folded into the adjoint
    lr2wv = lr * 2.0 * wv
    c_act = 1.0 - 2.0 * lr * wa    # folded (1 - lr * 2 * wa)

    def kernel(act_in_ref, pos0_ref, vel0_ref, tpos_ref, tvel_ref,
               act_out_ref, loss_ref):
        pos0 = pos0_ref[...]       # (rows, LANE) lane-dense
        vel0 = vel0_ref[...]
        tpos = tpos_ref[...]
        tvel = tvel_ref[...]

        def rollout_update(action):
            """One GD step: forward rollout (residuals) + exact adjoint.

            Returns (updated_action, pos_residuals, vel_residuals)."""
            pos, vel = pos0, vel0
            rp, rv = [], []
            for t in range(T):
                pos = pos + dt * vel
                vel = vel + dt * action[t]
                rp.append(pos - tpos)
                rv.append(vel - tvel)

            new_action = [None] * T
            g_pos = None
            g_vel = None
            for t in reversed(range(T)):
                if g_pos is None:
                    gp = lr2wp * rp[t]
                    gv = lr2wv * rv[t]
                else:
                    gp = g_pos + lr2wp * rp[t]
                    gv = g_vel + lr2wv * rv[t]
                # folded update: a - lr*(2*wa*a + dt*g_vel)
                new_action[t] = c_act * action[t] - dt * gv
                g_pos = gp
                g_vel = gv + dt * gp
            return tuple(new_action), rp, rv

        # Single dense load of the initial action plan; keep it in vregs.
        act_all = act_in_ref[...]                      # (T*rows, LANE)
        action0 = tuple(act_all[t * rows:(t + 1) * rows, :] for t in range(T))

        # Optimization steps 0 .. num_steps-2 : gradient only, no loss work.
        def gd_step(_, action):
            new_action, _, _ = rollout_update(action)
            return new_action

        action = lax.fori_loop(0, num_steps - 1, gd_step, action0)

        # Final step: loss is evaluated on the PRE-update action (matching the
        # reference semantics); single cross-lane reduction, scalar to SMEM.
        new_action, rp, rv = rollout_update(action)
        partial = None
        for t in range(T):
            term = (wp * (rp[t] * rp[t])
                    + wv * (rv[t] * rv[t])
                    + wa * (action[t] * action[t]))
            partial = term if partial is None else partial + term
        loss_ref[0, 0] = jnp.sum(partial)

        # Single dense store of the optimized plan.
        act_out_ref[...] = jnp.concatenate(new_action, axis=0)

    return kernel


def mpc_pallas(action_init, pos0, vel0, tpos, tvel, *,
               num_steps=40, lr=0.01, dt=0.1, wp=1.0, wv=0.1, wa=0.01):
    """action_init: (B, T, A). Returns (action (B, T, A), loss scalar)."""
    B, T, A = action_init.shape
    BA = B * A
    rows = (BA + LANE - 1) // LANE
    P = rows * LANE
    f32 = jnp.float32

    # Lane-dense packing done in the wrapper (not the kernel). Zero padding of
    # the batch*action axis is inert: padded residuals/grads/loss terms are 0.
    def pack_vec(x):
        flat = jnp.pad(x.reshape(BA).astype(f32), (0, P - BA))
        return flat.reshape(rows, LANE)

    act = jnp.transpose(action_init, (1, 0, 2)).reshape(T, BA).astype(f32)
    act = jnp.pad(act, ((0, 0), (0, P - BA))).reshape(T * rows, LANE)

    kernel = make_mpc_kernel(T, rows, num_steps, lr, dt, wp, wv, wa)
    vmem = pltpu.MemorySpace.VMEM
    smem = pltpu.MemorySpace.SMEM

    act_out, loss = pl.pallas_call(
        kernel,
        out_shape=(
            jax.ShapeDtypeStruct((T * rows, LANE), f32),
            jax.ShapeDtypeStruct((1, 1), f32),
        ),
        in_specs=[pl.BlockSpec(memory_space=vmem)] * 5,
        out_specs=(
            pl.BlockSpec(memory_space=vmem),
            pl.BlockSpec(memory_space=smem),   # scalar loss via SMEM
        ),
    )(act, pack_vec(pos0), pack_vec(vel0), pack_vec(tpos), pack_vec(tvel))

    act_unpacked = act_out.reshape(T, P)[:, :BA].reshape(T, B, A)
    action = jnp.transpose(act_unpacked, (1, 0, 2))
    return action, loss[0, 0]


def mpc_reference(action_init, pos0, vel0, tpos, tvel, *,
                  num_steps=40, lr=0.01, dt=0.1, wp=1.0, wv=0.1, wa=0.01):
    """Pure-JAX reference using jax.grad (mirrors torch.autograd.grad path)."""
    T = action_init.shape[1]

    def loss_fn(action):
        pos, vel = pos0, vel0
        loss = 0.0
        for t in range(T):
            pos = pos + dt * vel
            vel = vel + dt * action[:, t, :]
            loss = loss + (wp * jnp.sum((pos - tpos) ** 2)
                           + wv * jnp.sum((vel - tvel) ** 2)
                           + wa * jnp.sum(action[:, t, :] ** 2))
        return loss

    action = action_init
    loss = jnp.float32(0.0)
    for _ in range(num_steps):
        loss, g = jax.value_and_grad(loss_fn)(action)
        action = action - lr * g
    return action, loss


if __name__ == "__main__":
    # Deterministic small example (module defaults: action_size=2, lr=0.01,
    # std=0.3, num_optimization_step=40; horizon kept small at 8).
    B, T, A = 2, 8, 2
    STD = 0.3
    key = jax.random.PRNGKey(0)
    k_act, k_p0, k_v0, k_tp, k_tv = jax.random.split(key, 5)

    # _reset(): action = randn(B, T, A) * std
    action_init = jax.random.normal(k_act, (B, T, A), jnp.float32) * STD
    pos0 = jax.random.normal(k_p0, (B, A), jnp.float32)
    vel0 = jax.random.normal(k_v0, (B, A), jnp.float32)
    tpos = jax.random.normal(k_tp, (B, A), jnp.float32)
    tvel = jax.random.normal(k_tv, (B, A), jnp.float32)

    action_out, loss_out = mpc_pallas(action_init, pos0, vel0, tpos, tvel)
    jax.block_until_ready((action_out, loss_out))

    # Cross-check against a jax.grad-based reference of the same MPC loop.
    action_ref, loss_ref = mpc_reference(action_init, pos0, vel0, tpos, tvel)
    np.testing.assert_allclose(np.asarray(action_out), np.asarray(action_ref),
                               rtol=1e-4, atol=1e-4)
    np.testing.assert_allclose(float(loss_out), float(loss_ref),
                               rtol=1e-4, atol=1e-4)

    print("KERNEL_OK")
</pallas_src>

<mosaic_0001>
module attributes {stable_mosaic.version = 11 : i64} {
  func.func @kernel(%arg0: memref<8x128xf32, #tpu.memory_space<vmem>>, %arg1: memref<1x128xf32, #tpu.memory_space<vmem>>, %arg2: memref<1x128xf32, #tpu.memory_space<vmem>>, %arg3: memref<1x128xf32, #tpu.memory_space<vmem>>, %arg4: memref<1x128xf32, #tpu.memory_space<vmem>>, %arg5: memref<8x128xf32, #tpu.memory_space<vmem>>, %arg6: memref<1x1xf32, #tpu.memory_space<smem>>) attributes {dimension_semantics = [], scalar_prefetch = 0 : i64, scratch_operands = 0 : i64, tpu.core_type = #tpu.core_type<tc>} {
    %c0 = arith.constant 0 : index
    %c0_0 = arith.constant 0 : index
    %0 = vector.load %arg1[%c0, %c0_0] : memref<1x128xf32, #tpu.memory_space<vmem>>, vector<1x128xf32>
    %c0_1 = arith.constant 0 : index
    %c0_2 = arith.constant 0 : index
    %1 = vector.load %arg2[%c0_1, %c0_2] : memref<1x128xf32, #tpu.memory_space<vmem>>, vector<1x128xf32>
    %c0_3 = arith.constant 0 : index
    %c0_4 = arith.constant 0 : index
    %2 = vector.load %arg3[%c0_3, %c0_4] : memref<1x128xf32, #tpu.memory_space<vmem>>, vector<1x128xf32>
    %c0_5 = arith.constant 0 : index
    %c0_6 = arith.constant 0 : index
    %3 = vector.load %arg4[%c0_5, %c0_6] : memref<1x128xf32, #tpu.memory_space<vmem>>, vector<1x128xf32>
    %c0_7 = arith.constant 0 : index
    %c0_8 = arith.constant 0 : index
    %4 = vector.load %arg0[%c0_7, %c0_8] : memref<8x128xf32, #tpu.memory_space<vmem>>, vector<8x128xf32>
    %5 = vector.extract_strided_slice %4 {offsets = [0, 0], sizes = [1, 128], strides = [1, 1]} : vector<8x128xf32> to vector<1x128xf32>
    %6 = vector.extract_strided_slice %4 {offsets = [1, 0], sizes = [1, 128], strides = [1, 1]} : vector<8x128xf32> to vector<1x128xf32>
    %7 = vector.extract_strided_slice %4 {offsets = [2, 0], sizes = [1, 128], strides = [1, 1]} : vector<8x128xf32> to vector<1x128xf32>
    %8 = vector.extract_strided_slice %4 {offsets = [3, 0], sizes = [1, 128], strides = [1, 1]} : vector<8x128xf32> to vector<1x128xf32>
    %9 = vector.extract_strided_slice %4 {offsets = [4, 0], sizes = [1, 128], strides = [1, 1]} : vector<8x128xf32> to vector<1x128xf32>
    %10 = vector.extract_strided_slice %4 {offsets = [5, 0], sizes = [1, 128], strides = [1, 1]} : vector<8x128xf32> to vector<1x128xf32>
    %11 = vector.extract_strided_slice %4 {offsets = [6, 0], sizes = [1, 128], strides = [1, 1]} : vector<8x128xf32> to vector<1x128xf32>
    %12 = vector.extract_strided_slice %4 {offsets = [7, 0], sizes = [1, 128], strides = [1, 1]} : vector<8x128xf32> to vector<1x128xf32>
    %c0_i32 = arith.constant 0 : i32
    %c39_i32 = arith.constant 39 : i32
    %13 = arith.addi %c0_i32, %c39_i32 : i32
    %c1_i32 = arith.constant 1 : i32
    %14:8 = scf.for %arg7 = %c0_i32 to %13 step %c1_i32 iter_args(%arg8 = %5, %arg9 = %6, %arg10 = %7, %arg11 = %8, %arg12 = %9, %arg13 = %10, %arg14 = %11, %arg15 = %12) -> (vector<1x128xf32>, vector<1x128xf32>, vector<1x128xf32>, vector<1x128xf32>, vector<1x128xf32>, vector<1x128xf32>, vector<1x128xf32>, vector<1x128xf32>)  : i32 {
      %cst_91 = arith.constant 1.000000e-01 : f32
      %285 = vector.broadcast %cst_91 : f32 to vector<1x128xf32>
      %286 = arith.mulf %285, %1 : vector<1x128xf32>
      %287 = arith.addf %0, %286 : vector<1x128xf32>
      %cst_92 = arith.constant 1.000000e-01 : f32
      %288 = vector.broadcast %cst_92 : f32 to vector<1x128xf32>
      %289 = arith.mulf %288, %arg8 : vector<1x128xf32>
      %290 = arith.addf %1, %289 : vector<1x128xf32>
      %291 = arith.subf %290, %3 : vector<1x128xf32>
      %cst_93 = arith.constant 1.000000e-01 : f32
      %292 = vector.broadcast %cst_93 : f32 to vector<1x128xf32>
      %293 = arith.mulf %292, %290 : vector<1x128xf32>
      %294 = arith.addf %287, %293 : vector<1x128xf32>
      %cst_94 = arith.constant 1.000000e-01 : f32
      %295 = vector.broadcast %cst_94 : f32 to vector<1x128xf32>
      %296 = arith.mulf %295, %arg9 : vector<1x128xf32>
      %297 = arith.addf %290, %296 : vector<1x128xf32>
      %298 = arith.subf %294, %2 : vector<1x128xf32>
      %299 = arith.subf %297, %3 : vector<1x128xf32>
      %cst_95 = arith.constant 1.000000e-01 : f32
      %300 = vector.broadcast %cst_95 : f32 to vector<1x128xf32>
      %301 = arith.mulf %300, %297 : vector<1x128xf32>
      %302 = arith.addf %294, %301 : vector<1x128xf32>
      %cst_96 = arith.constant 1.000000e-01 : f32
      %303 = vector.broadcast %cst_96 : f32 to vector<1x128xf32>
      %304 = arith.mulf %303, %arg10 : vector<1x128xf32>
      %305 = arith.addf %297, %304 : vector<1x128xf32>
      %306 = arith.subf %302, %2 : vector<1x128xf32>
      %307 = arith.subf %305, %3 : vector<1x128xf32>
      %cst_97 = arith.constant 1.000000e-01 : f32
      %308 = vector.broadcast %cst_97 : f32 to vector<1x128xf32>
      %309 = arith.mulf %308, %305 : vector<1x128xf32>
      %310 = arith.addf %302, %309 : vector<1x128xf32>
      %cst_98 = arith.constant 1.000000e-01 : f32
      %311 = vector.broadcast %cst_98 : f32 to vector<1x128xf32>
      %312 = arith.mulf %311, %arg11 : vector<1x128xf32>
      %313 = arith.addf %305, %312 : vector<1x128xf32>
      %314 = arith.subf %310, %2 : vector<1x128xf32>
      %315 = arith.subf %313, %3 : vector<1x128xf32>
      %cst_99 = arith.constant 1.000000e-01 : f32
      %316 = vector.broadcast %cst_99 : f32 to vector<1x128xf32>
      %317 = arith.mulf %316, %313 : vector<1x128xf32>
      %318 = arith.addf %310, %317 : vector<1x128xf32>
      %cst_100 = arith.constant 1.000000e-01 : f32
      %319 = vector.broadcast %cst_100 : f32 to vector<1x128xf32>
      %320 = arith.mulf %319, %arg12 : vector<1x128xf32>
      %321 = arith.addf %313, %320 : vector<1x128xf32>
      %322 = arith.subf %318, %2 : vector<1x128xf32>
      %323 = arith.subf %321, %3 : vector<1x128xf32>
      %cst_101 = arith.constant 1.000000e-01 : f32
      %324 = vector.broadcast %cst_101 : f32 to vector<1x128xf32>
      %325 = arith.mulf %324, %321 : vector<1x128xf32>
      %326 = arith.addf %318, %325 : vector<1x128xf32>
      %cst_102 = arith.constant 1.000000e-01 : f32
      %327 = vector.broadcast %cst_102 : f32 to vector<1x128xf32>
      %328 = arith.mulf %327, %arg13 : vector<1x128xf32>
      %329 = arith.addf %321, %328 : vector<1x128xf32>
      %330 = arith.subf %326, %2 : vector<1x128xf32>
      %331 = arith.subf %329, %3 : vector<1x128xf32>
      %cst_103 = arith.constant 1.000000e-01 : f32
      %332 = vector.broadcast %cst_103 : f32 to vector<1x128xf32>
      %333 = arith.mulf %332, %329 : vector<1x128xf32>
      %334 = arith.addf %326, %333 : vector<1x128xf32>
      %cst_104 = arith.constant 1.000000e-01 : f32
      %335 = vector.broadcast %cst_104 : f32 to vector<1x128xf32>
      %336 = arith.mulf %335, %arg14 : vector<1x128xf32>
      %337 = arith.addf %329, %336 : vector<1x128xf32>
      %338 = arith.subf %334, %2 : vector<1x128xf32>
      %339 = arith.subf %337, %3 : vector<1x128xf32>
      %cst_105 = arith.constant 1.000000e-01 : f32
      %340 = vector.broadcast %cst_105 : f32 to vector<1x128xf32>
      %341 = arith.mulf %340, %337 : vector<1x128xf32>
      %342 = arith.addf %334, %341 : vector<1x128xf32>
      %cst_106 = arith.constant 1.000000e-01 : f32
      %343 = vector.broadcast %cst_106 : f32 to vector<1x128xf32>
      %344 = arith.mulf %343, %arg15 : vector<1x128xf32>
      %345 = arith.addf %337, %344 : vector<1x128xf32>
      %346 = arith.subf %342, %2 : vector<1x128xf32>
      %347 = arith.subf %345, %3 : vector<1x128xf32>
      %cst_107 = arith.constant 2.000000e-02 : f32
      %348 = vector.broadcast %cst_107 : f32 to vector<1x128xf32>
      %349 = arith.mulf %348, %346 : vector<1x128xf32>
      %cst_108 = arith.constant 2.000000e-03 : f32
      %350 = vector.broadcast %cst_108 : f32 to vector<1x128xf32>
      %351 = arith.mulf %350, %347 : vector<1x128xf32>
      %cst_109 = arith.constant 9.998000e-01 : f32
      %352 = vector.broadcast %cst_109 : f32 to vector<1x128xf32>
      %353 = arith.mulf %352, %arg15 : vector<1x128xf32>
      %cst_110 = arith.constant 1.000000e-01 : f32
      %354 = vector.broadcast %cst_110 : f32 to vector<1x128xf32>
      %355 = arith.mulf %354, %351 : vector<1x128xf32>
      %356 = arith.subf %353, %355 : vector<1x128xf32>
      %cst_111 = arith.constant 1.000000e-01 : f32
      %357 = vector.broadcast %cst_111 : f32 to vector<1x128xf32>
      %358 = arith.mulf %357, %349 : vector<1x128xf32>
      %359 = arith.addf %351, %358 : vector<1x128xf32>
      %cst_112 = arith.constant 2.000000e-02 : f32
      %360 = vector.broadcast %cst_112 : f32 to vector<1x128xf32>
      %361 = arith.mulf %360, %338 : vector<1x128xf32>
      %362 = arith.addf %349, %361 : vector<1x128xf32>
      %cst_113 = arith.constant 2.000000e-03 : f32
      %363 = vector.broadcast %cst_113 : f32 to vector<1x128xf32>
      %364 = arith.mulf %363, %339 : vector<1x128xf32>
      %365 = arith.addf %359, %364 : vector<1x128xf32>
      %cst_114 = arith.constant 9.998000e-01 : f32
      %366 = vector.broadcast %cst_114 : f32 to vector<1x128xf32>
      %367 = arith.mulf %366, %arg14 : vector<1x128xf32>
      %cst_115 = arith.constant 1.000000e-01 : f32
      %368 = vector.broadcast %cst_115 : f32 to vector<1x128xf32>
      %369 = arith.mulf %368, %365 : vector<1x128xf32>
      %370 = arith.subf %367, %369 : vector<1x128xf32>
      %cst_116 = arith.constant 1.000000e-01 : f32
      %371 = vector.broadcast %cst_116 : f32 to vector<1x128xf32>
      %372 = arith.mulf %371, %362 : vector<1x128xf32>
      %373 = arith.addf %365, %372 : vector<1x128xf32>
      %cst_117 = arith.constant 2.000000e-02 : f32
      %374 = vector.broadcast %cst_117 : f32 to vector<1x128xf32>
      %375 = arith.mulf %374, %330 : vector<1x128xf32>
      %376 = arith.addf %362, %375 : vector<1x128xf32>
      %cst_118 = arith.constant 2.000000e-03 : f32
      %377 = vector.broadcast %cst_118 : f32 to vector<1x128xf32>
      %378 = arith.mulf %377, %331 : vector<1x128xf32>
      %379 = arith.addf %373, %378 : vector<1x128xf32>
      %cst_119 = arith.constant 9.998000e-01 : f32
      %380 = vector.broadcast %cst_119 : f32 to vector<1x128xf32>
      %381 = arith.mulf %380, %arg13 : vector<1x128xf32>
      %cst_120 = arith.constant 1.000000e-01 : f32
      %382 = vector.broadcast %cst_120 : f32 to vector<1x128xf32>
      %383 = arith.mulf %382, %379 : vector<1x128xf32>
      %384 = arith.subf %381, %383 : vector<1x128xf32>
      %cst_121 = arith.constant 1.000000e-01 : f32
      %385 = vector.broadcast %cst_121 : f32 to vector<1x128xf32>
      %386 = arith.mulf %385, %376 : vector<1x128xf32>
      %387 = arith.addf %379, %386 : vector<1x128xf32>
      %cst_122 = arith.constant 2.000000e-02 : f32
      %388 = vector.broadcast %cst_122 : f32 to vector<1x128xf32>
      %389 = arith.mulf %388, %322 : vector<1x128xf32>
      %390 = arith.addf %376, %389 : vector<1x128xf32>
      %cst_123 = arith.constant 2.000000e-03 : f32
      %391 = vector.broadcast %cst_123 : f32 to vector<1x128xf32>
      %392 = arith.mulf %391, %323 : vector<1x128xf32>
      %393 = arith.addf %387, %392 : vector<1x128xf32>
      %cst_124 = arith.constant 9.998000e-01 : f32
      %394 = vector.broadcast %cst_124 : f32 to vector<1x128xf32>
      %395 = arith.mulf %394, %arg12 : vector<1x128xf32>
      %cst_125 = arith.constant 1.000000e-01 : f32
      %396 = vector.broadcast %cst_125 : f32 to vector<1x128xf32>
      %397 = arith.mulf %396, %393 : vector<1x128xf32>
      %398 = arith.subf %395, %397 : vector<1x128xf32>
      %cst_126 = arith.constant 1.000000e-01 : f32
      %399 = vector.broadcast %cst_126 : f32 to vector<1x128xf32>
      %400 = arith.mulf %399, %390 : vector<1x128xf32>
      %401 = arith.addf %393, %400 : vector<1x128xf32>
      %cst_127 = arith.constant 2.000000e-02 : f32
      %402 = vector.broadcast %cst_127 : f32 to vector<1x128xf32>
      %403 = arith.mulf %402, %314 : vector<1x128xf32>
      %404 = arith.addf %390, %403 : vector<1x128xf32>
      %cst_128 = arith.constant 2.000000e-03 : f32
      %405 = vector.broadcast %cst_128 : f32 to vector<1x128xf32>
      %406 = arith.mulf %405, %315 : vector<1x128xf32>
      %407 = arith.addf %401, %406 : vector<1x128xf32>
      %cst_129 = arith.constant 9.998000e-01 : f32
      %408 = vector.broadcast %cst_129 : f32 to vector<1x128xf32>
      %409 = arith.mulf %408, %arg11 : vector<1x128xf32>
      %cst_130 = arith.constant 1.000000e-01 : f32
      %410 = vector.broadcast %cst_130 : f32 to vector<1x128xf32>
      %411 = arith.mulf %410, %407 : vector<1x128xf32>
      %412 = arith.subf %409, %411 : vector<1x128xf32>
      %cst_131 = arith.constant 1.000000e-01 : f32
      %413 = vector.broadcast %cst_131 : f32 to vector<1x128xf32>
      %414 = arith.mulf %413, %404 : vector<1x128xf32>
      %415 = arith.addf %407, %414 : vector<1x128xf32>
      %cst_132 = arith.constant 2.000000e-02 : f32
      %416 = vector.broadcast %cst_132 : f32 to vector<1x128xf32>
      %417 = arith.mulf %416, %306 : vector<1x128xf32>
      %418 = arith.addf %404, %417 : vector<1x128xf32>
      %cst_133 = arith.constant 2.000000e-03 : f32
      %419 = vector.broadcast %cst_133 : f32 to vector<1x128xf32>
      %420 = arith.mulf %419, %307 : vector<1x128xf32>
      %421 = arith.addf %415, %420 : vector<1x128xf32>
      %cst_134 = arith.constant 9.998000e-01 : f32
      %422 = vector.broadcast %cst_134 : f32 to vector<1x128xf32>
      %423 = arith.mulf %422, %arg10 : vector<1x128xf32>
      %cst_135 = arith.constant 1.000000e-01 : f32
      %424 = vector.broadcast %cst_135 : f32 to vector<1x128xf32>
      %425 = arith.mulf %424, %421 : vector<1x128xf32>
      %426 = arith.subf %423, %425 : vector<1x128xf32>
      %cst_136 = arith.constant 1.000000e-01 : f32
      %427 = vector.broadcast %cst_136 : f32 to vector<1x128xf32>
      %428 = arith.mulf %427, %418 : vector<1x128xf32>
      %429 = arith.addf %421, %428 : vector<1x128xf32>
      %cst_137 = arith.constant 2.000000e-02 : f32
      %430 = vector.broadcast %cst_137 : f32 to vector<1x128xf32>
      %431 = arith.mulf %430, %298 : vector<1x128xf32>
      %432 = arith.addf %418, %431 : vector<1x128xf32>
      %cst_138 = arith.constant 2.000000e-03 : f32
      %433 = vector.broadcast %cst_138 : f32 to vector<1x128xf32>
      %434 = arith.mulf %433, %299 : vector<1x128xf32>
      %435 = arith.addf %429, %434 : vector<1x128xf32>
      %cst_139 = arith.constant 9.998000e-01 : f32
      %436 = vector.broadcast %cst_139 : f32 to vector<1x128xf32>
      %437 = arith.mulf %436, %arg9 : vector<1x128xf32>
      %cst_140 = arith.constant 1.000000e-01 : f32
      %438 = vector.broadcast %cst_140 : f32 to vector<1x128xf32>
      %439 = arith.mulf %438, %435 : vector<1x128xf32>
      %440 = arith.subf %437, %439 : vector<1x128xf32>
      %cst_141 = arith.constant 1.000000e-01 : f32
      %441 = vector.broadcast %cst_141 : f32 to vector<1x128xf32>
      %442 = arith.mulf %441, %432 : vector<1x128xf32>
      %443 = arith.addf %435, %442 : vector<1x128xf32>
      %cst_142 = arith.constant 2.000000e-03 : f32
      %444 = vector.broadcast %cst_142 : f32 to vector<1x128xf32>
      %445 = arith.mulf %444, %291 : vector<1x128xf32>
      %446 = arith.addf %443, %445 : vector<1x128xf32>
      %cst_143 = arith.constant 9.998000e-01 : f32
      %447 = vector.broadcast %cst_143 : f32 to vector<1x128xf32>
      %448 = arith.mulf %447, %arg8 : vector<1x128xf32>
      %cst_144 = arith.constant 1.000000e-01 : f32
      %449 = vector.broadcast %cst_144 : f32 to vector<1x128xf32>
      %450 = arith.mulf %449, %446 : vector<1x128xf32>
      %451 = arith.subf %448, %450 : vector<1x128xf32>
      scf.yield %451, %440, %426, %412, %398, %384, %370, %356 : vector<1x128xf32>, vector<1x128xf32>, vector<1x128xf32>, vector<1x128xf32>, vector<1x128xf32>, vector<1x128xf32>, vector<1x128xf32>, vector<1x128xf32>
    }
    %cst = arith.constant 1.000000e-01 : f32
    %15 = vector.broadcast %cst : f32 to vector<1x128xf32>
    %16 = arith.mulf %15, %1 : vector<1x128xf32>
    %17 = arith.addf %0, %16 : vector<1x128xf32>
    %cst_9 = arith.constant 1.000000e-01 : f32
    %18 = vector.broadcast %cst_9 : f32 to vector<1x128xf32>
    %19 = arith.mulf %18, %14#0 : vector<1x128xf32>
    %20 = arith.addf %1, %19 : vector<1x128xf32>
    %21 = arith.subf %17, %2 : vector<1x128xf32>
    %22 = arith.subf %20, %3 : vector<1x128xf32>
    %cst_10 = arith.constant 1.000000e-01 : f32
    %23 = vector.broadcast %cst_10 : f32 to vector<1x128xf32>
    %24 = arith.mulf %23, %20 : vector<1x128xf32>
    %25 = arith.addf %17, %24 : vector<1x128xf32>
    %cst_11 = arith.constant 1.000000e-01 : f32
    %26 = vector.broadcast %cst_11 : f32 to vector<1x128xf32>
    %27 = arith.mulf %26, %14#1 : vector<1x128xf32>
    %28 = arith.addf %20, %27 : vector<1x128xf32>
    %29 = arith.subf %25, %2 : vector<1x128xf32>
    %30 = arith.subf %28, %3 : vector<1x128xf32>
    %cst_12 = arith.constant 1.000000e-01 : f32
    %31 = vector.broadcast %cst_12 : f32 to vector<1x128xf32>
    %32 = arith.mulf %31, %28 : vector<1x128xf32>
    %33 = arith.addf %25, %32 : vector<1x128xf32>
    %cst_13 = arith.constant 1.000000e-01 : f32
    %34 = vector.broadcast %cst_13 : f32 to vector<1x128xf32>
    %35 = arith.mulf %34, %14#2 : vector<1x128xf32>
    %36 = arith.addf %28, %35 : vector<1x128xf32>
    %37 = arith.subf %33, %2 : vector<1x128xf32>
    %38 = arith.subf %36, %3 : vector<1x128xf32>
    %cst_14 = arith.constant 1.000000e-01 : f32
    %39 = vector.broadcast %cst_14 : f32 to vector<1x128xf32>
    %40 = arith.mulf %39, %36 : vector<1x128xf32>
    %41 = arith.addf %33, %40 : vector<1x128xf32>
    %cst_15 = arith.constant 1.000000e-01 : f32
    %42 = vector.broadcast %cst_15 : f32 to vector<1x128xf32>
    %43 = arith.mulf %42, %14#3 : vector<1x128xf32>
    %44 = arith.addf %36, %43 : vector<1x128xf32>
    %45 = arith.subf %41, %2 : vector<1x128xf32>
    %46 = arith.subf %44, %3 : vector<1x128xf32>
    %cst_16 = arith.constant 1.000000e-01 : f32
    %47 = vector.broadcast %cst_16 : f32 to vector<1x128xf32>
    %48 = arith.mulf %47, %44 : vector<1x128xf32>
    %49 = arith.addf %41, %48 : vector<1x128xf32>
    %cst_17 = arith.constant 1.000000e-01 : f32
    %50 = vector.broadcast %cst_17 : f32 to vector<1x128xf32>
    %51 = arith.mulf %50, %14#4 : vector<1x128xf32>
    %52 = arith.addf %44, %51 : vector<1x128xf32>
    %53 = arith.subf %49, %2 : vector<1x128xf32>
    %54 = arith.subf %52, %3 : vector<1x128xf32>
    %cst_18 = arith.constant 1.000000e-01 : f32
    %55 = vector.broadcast %cst_18 : f32 to vector<1x128xf32>
    %56 = arith.mulf %55, %52 : vector<1x128xf32>
    %57 = arith.addf %49, %56 : vector<1x128xf32>
    %cst_19 = arith.constant 1.000000e-01 : f32
    %58 = vector.broadcast %cst_19 : f32 to vector<1x128xf32>
    %59 = arith.mulf %58, %14#5 : vector<1x128xf32>
    %60 = arith.addf %52, %59 : vector<1x128xf32>
    %61 = arith.subf %57, %2 : vector<1x128xf32>
    %62 = arith.subf %60, %3 : vector<1x128xf32>
    %cst_20 = arith.constant 1.000000e-01 : f32
    %63 = vector.broadcast %cst_20 : f32 to vector<1x128xf32>
    %64 = arith.mulf %63, %60 : vector<1x128xf32>
    %65 = arith.addf %57, %64 : vector<1x128xf32>
    %cst_21 = arith.constant 1.000000e-01 : f32
    %66 = vector.broadcast %cst_21 : f32 to vector<1x128xf32>
    %67 = arith.mulf %66, %14#6 : vector<1x128xf32>
    %68 = arith.addf %60, %67 : vector<1x128xf32>
    %69 = arith.subf %65, %2 : vector<1x128xf32>
    %70 = arith.subf %68, %3 : vector<1x128xf32>
    %cst_22 = arith.constant 1.000000e-01 : f32
    %71 = vector.broadcast %cst_22 : f32 to vector<1x128xf32>
    %72 = arith.mulf %71, %68 : vector<1x128xf32>
    %73 = arith.addf %65, %72 : vector<1x128xf32>
    %cst_23 = arith.constant 1.000000e-01 : f32
    %74 = vector.broadcast %cst_23 : f32 to vector<1x128xf32>
    %75 = arith.mulf %74, %14#7 : vector<1x128xf32>
    %76 = arith.addf %68, %75 : vector<1x128xf32>
    %77 = arith.subf %73, %2 : vector<1x128xf32>
    %78 = arith.subf %76, %3 : vector<1x128xf32>
    %cst_24 = arith.constant 2.000000e-02 : f32
    %79 = vector.broadcast %cst_24 : f32 to vector<1x128xf32>
    %80 = arith.mulf %79, %77 : vector<1x128xf32>
    %cst_25 = arith.constant 2.000000e-03 : f32
    %81 = vector.broadcast %cst_25 : f32 to vector<1x128xf32>
    %82 = arith.mulf %81, %78 : vector<1x128xf32>
    %cst_26 = arith.constant 9.998000e-01 : f32
    %83 = vector.broadcast %cst_26 : f32 to vector<1x128xf32>
    %84 = arith.mulf %83, %14#7 : vector<1x128xf32>
    %cst_27 = arith.constant 1.000000e-01 : f32
    %85 = vector.broadcast %cst_27 : f32 to vector<1x128xf32>
    %86 = arith.mulf %85, %82 : vector<1x128xf32>
    %87 = arith.subf %84, %86 : vector<1x128xf32>
    %cst_28 = arith.constant 1.000000e-01 : f32
    %88 = vector.broadcast %cst_28 : f32 to vector<1x128xf32>
    %89 = arith.mulf %88, %80 : vector<1x128xf32>
    %90 = arith.addf %82, %89 : vector<1x128xf32>
    %cst_29 = arith.constant 2.000000e-02 : f32
    %91 = vector.broadcast %cst_29 : f32 to vector<1x128xf32>
    %92 = arith.mulf %91, %69 : vector<1x128xf32>
    %93 = arith.addf %80, %92 : vector<1x128xf32>
    %cst_30 = arith.constant 2.000000e-03 : f32
    %94 = vector.broadcast %cst_30 : f32 to vector<1x128xf32>
    %95 = arith.mulf %94, %70 : vector<1x128xf32>
    %96 = arith.addf %90, %95 : vector<1x128xf32>
    %cst_31 = arith.constant 9.998000e-01 : f32
    %97 = vector.broadcast %cst_31 : f32 to vector<1x128xf32>
    %98 = arith.mulf %97, %14#6 : vector<1x128xf32>
    %cst_32 = arith.constant 1.000000e-01 : f32
    %99 = vector.broadcast %cst_32 : f32 to vector<1x128xf32>
    %100 = arith.mulf %99, %96 : vector<1x128xf32>
    %101 = arith.subf %98, %100 : vector<1x128xf32>
    %cst_33 = arith.constant 1.000000e-01 : f32
    %102 = vector.broadcast %cst_33 : f32 to vector<1x128xf32>
    %103 = arith.mulf %102, %93 : vector<1x128xf32>
    %104 = arith.addf %96, %103 : vector<1x128xf32>
    %cst_34 = arith.constant 2.000000e-02 : f32
    %105 = vector.broadcast %cst_34 : f32 to vector<1x128xf32>
    %106 = arith.mulf %105, %61 : vector<1x128xf32>
    %107 = arith.addf %93, %106 : vector<1x128xf32>
    %cst_35 = arith.constant 2.000000e-03 : f32
    %108 = vector.broadcast %cst_35 : f32 to vector<1x128xf32>
    %109 = arith.mulf %108, %62 : vector<1x128xf32>
    %110 = arith.addf %104, %109 : vector<1x128xf32>
    %cst_36 = arith.constant 9.998000e-01 : f32
    %111 = vector.broadcast %cst_36 : f32 to vector<1x128xf32>
    %112 = arith.mulf %111, %14#5 : vector<1x128xf32>
    %cst_37 = arith.constant 1.000000e-01 : f32
    %113 = vector.broadcast %cst_37 : f32 to vector<1x128xf32>
    %114 = arith.mulf %113, %110 : vector<1x128xf32>
    %115 = arith.subf %112, %114 : vector<1x128xf32>
    %cst_38 = arith.constant 1.000000e-01 : f32
    %116 = vector.broadcast %cst_38 : f32 to vector<1x128xf32>
    %117 = arith.mulf %116, %107 : vector<1x128xf32>
    %118 = arith.addf %110, %117 : vector<1x128xf32>
    %cst_39 = arith.constant 2.000000e-02 : f32
    %119 = vector.broadcast %cst_39 : f32 to vector<1x128xf32>
    %120 = arith.mulf %119, %53 : vector<1x128xf32>
    %121 = arith.addf %107, %120 : vector<1x128xf32>
    %cst_40 = arith.constant 2.000000e-03 : f32
    %122 = vector.broadcast %cst_40 : f32 to vector<1x128xf32>
    %123 = arith.mulf %122, %54 : vector<1x128xf32>
    %124 = arith.addf %118, %123 : vector<1x128xf32>
    %cst_41 = arith.constant 9.998000e-01 : f32
    %125 = vector.broadcast %cst_41 : f32 to vector<1x128xf32>
    %126 = arith.mulf %125, %14#4 : vector<1x128xf32>
    %cst_42 = arith.constant 1.000000e-01 : f32
    %127 = vector.broadcast %cst_42 : f32 to vector<1x128xf32>
    %128 = arith.mulf %127, %124 : vector<1x128xf32>
    %129 = arith.subf %126, %128 : vector<1x128xf32>
    %cst_43 = arith.constant 1.000000e-01 : f32
    %130 = vector.broadcast %cst_43 : f32 to vector<1x128xf32>
    %131 = arith.mulf %130, %121 : vector<1x128xf32>
    %132 = arith.addf %124, %131 : vector<1x128xf32>
    %cst_44 = arith.constant 2.000000e-02 : f32
    %133 = vector.broadcast %cst_44 : f32 to vector<1x128xf32>
    %134 = arith.mulf %133, %45 : vector<1x128xf32>
    %135 = arith.addf %121, %134 : vector<1x128xf32>
    %cst_45 = arith.constant 2.000000e-03 : f32
    %136 = vector.broadcast %cst_45 : f32 to vector<1x128xf32>
    %137 = arith.mulf %136, %46 : vector<1x128xf32>
    %138 = arith.addf %132, %137 : vector<1x128xf32>
    %cst_46 = arith.constant 9.998000e-01 : f32
    %139 = vector.broadcast %cst_46 : f32 to vector<1x128xf32>
    %140 = arith.mulf %139, %14#3 : vector<1x128xf32>
    %cst_47 = arith.constant 1.000000e-01 : f32
    %141 = vector.broadcast %cst_47 : f32 to vector<1x128xf32>
    %142 = arith.mulf %141, %138 : vector<1x128xf32>
    %143 = arith.subf %140, %142 : vector<1x128xf32>
    %cst_48 = arith.constant 1.000000e-01 : f32
    %144 = vector.broadcast %cst_48 : f32 to vector<1x128xf32>
    %145 = arith.mulf %144, %135 : vector<1x128xf32>
    %146 = arith.addf %138, %145 : vector<1x128xf32>
    %cst_49 = arith.constant 2.000000e-02 : f32
    %147 = vector.broadcast %cst_49 : f32 to vector<1x128xf32>
    %148 = arith.mulf %147, %37 : vector<1x128xf32>
    %149 = arith.addf %135, %148 : vector<1x128xf32>
    %cst_50 = arith.constant 2.000000e-03 : f32
    %150 = vector.broadcast %cst_50 : f32 to vector<1x128xf32>
    %151 = arith.mulf %150, %38 : vector<1x128xf32>
    %152 = arith.addf %146, %151 : vector<1x128xf32>
    %cst_51 = arith.constant 9.998000e-01 : f32
    %153 = vector.broadcast %cst_51 : f32 to vector<1x128xf32>
    %154 = arith.mulf %153, %14#2 : vector<1x128xf32>
    %cst_52 = arith.constant 1.000000e-01 : f32
    %155 = vector.broadcast %cst_52 : f32 to vector<1x128xf32>
    %156 = arith.mulf %155, %152 : vector<1x128xf32>
    %157 = arith.subf %154, %156 : vector<1x128xf32>
    %cst_53 = arith.constant 1.000000e-01 : f32
    %158 = vector.broadcast %cst_53 : f32 to vector<1x128xf32>
    %159 = arith.mulf %158, %149 : vector<1x128xf32>
    %160 = arith.addf %152, %159 : vector<1x128xf32>
    %cst_54 = arith.constant 2.000000e-02 : f32
    %161 = vector.broadcast %cst_54 : f32 to vector<1x128xf32>
    %162 = arith.mulf %161, %29 : vector<1x128xf32>
    %163 = arith.addf %149, %162 : vector<1x128xf32>
    %cst_55 = arith.constant 2.000000e-03 : f32
    %164 = vector.broadcast %cst_55 : f32 to vector<1x128xf32>
    %165 = arith.mulf %164, %30 : vector<1x128xf32>
    %166 = arith.addf %160, %165 : vector<1x128xf32>
    %cst_56 = arith.constant 9.998000e-01 : f32
    %167 = vector.broadcast %cst_56 : f32 to vector<1x128xf32>
    %168 = arith.mulf %167, %14#1 : vector<1x128xf32>
    %cst_57 = arith.constant 1.000000e-01 : f32
    %169 = vector.broadcast %cst_57 : f32 to vector<1x128xf32>
    %170 = arith.mulf %169, %166 : vector<1x128xf32>
    %171 = arith.subf %168, %170 : vector<1x128xf32>
    %cst_58 = arith.constant 1.000000e-01 : f32
    %172 = vector.broadcast %cst_58 : f32 to vector<1x128xf32>
    %173 = arith.mulf %172, %163 : vector<1x128xf32>
    %174 = arith.addf %166, %173 : vector<1x128xf32>
    %cst_59 = arith.constant 2.000000e-03 : f32
    %175 = vector.broadcast %cst_59 : f32 to vector<1x128xf32>
    %176 = arith.mulf %175, %22 : vector<1x128xf32>
    %177 = arith.addf %174, %176 : vector<1x128xf32>
    %cst_60 = arith.constant 9.998000e-01 : f32
    %178 = vector.broadcast %cst_60 : f32 to vector<1x128xf32>
    %179 = arith.mulf %178, %14#0 : vector<1x128xf32>
    %cst_61 = arith.constant 1.000000e-01 : f32
    %180 = vector.broadcast %cst_61 : f32 to vector<1x128xf32>
    %181 = arith.mulf %180, %177 : vector<1x128xf32>
    %182 = arith.subf %179, %181 : vector<1x128xf32>
    %183 = arith.mulf %21, %21 : vector<1x128xf32>
    %cst_62 = arith.constant 1.000000e+00 : f32
    %184 = vector.broadcast %cst_62 : f32 to vector<1x128xf32>
    %185 = arith.mulf %184, %183 : vector<1x128xf32>
    %186 = arith.mulf %22, %22 : vector<1x128xf32>
    %cst_63 = arith.constant 1.000000e-01 : f32
    %187 = vector.broadcast %cst_63 : f32 to vector<1x128xf32>
    %188 = arith.mulf %187, %186 : vector<1x128xf32>
    %189 = arith.addf %185, %188 : vector<1x128xf32>
    %190 = arith.mulf %14#0, %14#0 : vector<1x128xf32>
    %cst_64 = arith.constant 0.00999999977 : f32
    %191 = vector.broadcast %cst_64 : f32 to vector<1x128xf32>
    %192 = arith.mulf %191, %190 : vector<1x128xf32>
    %193 = arith.addf %189, %192 : vector<1x128xf32>
    %194 = arith.mulf %29, %29 : vector<1x128xf32>
    %cst_65 = arith.constant 1.000000e+00 : f32
    %195 = vector.broadcast %cst_65 : f32 to vector<1x128xf32>
    %196 = arith.mulf %195, %194 : vector<1x128xf32>
    %197 = arith.mulf %30, %30 : vector<1x128xf32>
    %cst_66 = arith.constant 1.000000e-01 : f32
    %198 = vector.broadcast %cst_66 : f32 to vector<1x128xf32>
    %199 = arith.mulf %198, %197 : vector<1x128xf32>
    %200 = arith.addf %196, %199 : vector<1x128xf32>
    %201 = arith.mulf %14#1, %14#1 : vector<1x128xf32>
    %cst_67 = arith.constant 0.00999999977 : f32
    %202 = vector.broadcast %cst_67 : f32 to vector<1x128xf32>
    %203 = arith.mulf %202, %201 : vector<1x128xf32>
    %204 = arith.addf %200, %203 : vector<1x128xf32>
    %205 = arith.addf %193, %204 : vector<1x128xf32>
    %206 = arith.mulf %37, %37 : vector<1x128xf32>
    %cst_68 = arith.constant 1.000000e+00 : f32
    %207 = vector.broadcast %cst_68 : f32 to vector<1x128xf32>
    %208 = arith.mulf %207, %206 : vector<1x128xf32>
    %209 = arith.mulf %38, %38 : vector<1x128xf32>
    %cst_69 = arith.constant 1.000000e-01 : f32
    %210 = vector.broadcast %cst_69 : f32 to vector<1x128xf32>
    %211 = arith.mulf %210, %209 : vector<1x128xf32>
    %212 = arith.addf %208, %211 : vector<1x128xf32>
    %213 = arith.mulf %14#2, %14#2 : vector<1x128xf32>
    %cst_70 = arith.constant 0.00999999977 : f32
    %214 = vector.broadcast %cst_70 : f32 to vector<1x128xf32>
    %215 = arith.mulf %214, %213 : vector<1x128xf32>
    %216 = arith.addf %212, %215 : vector<1x128xf32>
    %217 = arith.addf %205, %216 : vector<1x128xf32>
    %218 = arith.mulf %45, %45 : vector<1x128xf32>
    %cst_71 = arith.constant 1.000000e+00 : f32
    %219 = vector.broadcast %cst_71 : f32 to vector<1x128xf32>
    %220 = arith.mulf %219, %218 : vector<1x128xf32>
    %221 = arith.mulf %46, %46 : vector<1x128xf32>
    %cst_72 = arith.constant 1.000000e-01 : f32
    %222 = vector.broadcast %cst_72 : f32 to vector<1x128xf32>
    %223 = arith.mulf %222, %221 : vector<1x128xf32>
    %224 = arith.addf %220, %223 : vector<1x128xf32>
    %225 = arith.mulf %14#3, %14#3 : vector<1x128xf32>
    %cst_73 = arith.constant 0.00999999977 : f32
    %226 = vector.broadcast %cst_73 : f32 to vector<1x128xf32>
    %227 = arith.mulf %226, %225 : vector<1x128xf32>
    %228 = arith.addf %224, %227 : vector<1x128xf32>
    %229 = arith.addf %217, %228 : vector<1x128xf32>
    %230 = arith.mulf %53, %53 : vector<1x128xf32>
    %cst_74 = arith.constant 1.000000e+00 : f32
    %231 = vector.broadcast %cst_74 : f32 to vector<1x128xf32>
    %232 = arith.mulf %231, %230 : vector<1x128xf32>
    %233 = arith.mulf %54, %54 : vector<1x128xf32>
    %cst_75 = arith.constant 1.000000e-01 : f32
    %234 = vector.broadcast %cst_75 : f32 to vector<1x128xf32>
    %235 = arith.mulf %234, %233 : vector<1x128xf32>
    %236 = arith.addf %232, %235 : vector<1x128xf32>
    %237 = arith.mulf %14#4, %14#4 : vector<1x128xf32>
    %cst_76 = arith.constant 0.00999999977 : f32
    %238 = vector.broadcast %cst_76 : f32 to vector<1x128xf32>
    %239 = arith.mulf %238, %237 : vector<1x128xf32>
    %240 = arith.addf %236, %239 : vector<1x128xf32>
    %241 = arith.addf %229, %240 : vector<1x128xf32>
    %242 = arith.mulf %61, %61 : vector<1x128xf32>
    %cst_77 = arith.constant 1.000000e+00 : f32
    %243 = vector.broadcast %cst_77 : f32 to vector<1x128xf32>
    %244 = arith.mulf %243, %242 : vector<1x128xf32>
    %245 = arith.mulf %62, %62 : vector<1x128xf32>
    %cst_78 = arith.constant 1.000000e-01 : f32
    %246 = vector.broadcast %cst_78 : f32 to vector<1x128xf32>
    %247 = arith.mulf %246, %245 : vector<1x128xf32>
    %248 = arith.addf %244, %247 : vector<1x128xf32>
    %249 = arith.mulf %14#5, %14#5 : vector<1x128xf32>
    %cst_79 = arith.constant 0.00999999977 : f32
    %250 = vector.broadcast %cst_79 : f32 to vector<1x128xf32>
    %251 = arith.mulf %250, %249 : vector<1x128xf32>
    %252 = arith.addf %248, %251 : vector<1x128xf32>
    %253 = arith.addf %241, %252 : vector<1x128xf32>
    %254 = arith.mulf %69, %69 : vector<1x128xf32>
    %cst_80 = arith.constant 1.000000e+00 : f32
    %255 = vector.broadcast %cst_80 : f32 to vector<1x128xf32>
    %256 = arith.mulf %255, %254 : vector<1x128xf32>
    %257 = arith.mulf %70, %70 : vector<1x128xf32>
    %cst_81 = arith.constant 1.000000e-01 : f32
    %258 = vector.broadcast %cst_81 : f32 to vector<1x128xf32>
    %259 = arith.mulf %258, %257 : vector<1x128xf32>
    %260 = arith.addf %256, %259 : vector<1x128xf32>
    %261 = arith.mulf %14#6, %14#6 : vector<1x128xf32>
    %cst_82 = arith.constant 0.00999999977 : f32
    %262 = vector.broadcast %cst_82 : f32 to vector<1x128xf32>
    %263 = arith.mulf %262, %261 : vector<1x128xf32>
    %264 = arith.addf %260, %263 : vector<1x128xf32>
    %265 = arith.addf %253, %264 : vector<1x128xf32>
    %266 = arith.mulf %77, %77 : vector<1x128xf32>
    %cst_83 = arith.constant 1.000000e+00 : f32
    %267 = vector.broadcast %cst_83 : f32 to vector<1x128xf32>
    %268 = arith.mulf %267, %266 : vector<1x128xf32>
    %269 = arith.mulf %78, %78 : vector<1x128xf32>
    %cst_84 = arith.constant 1.000000e-01 : f32
    %270 = vector.broadcast %cst_84 : f32 to vector<1x128xf32>
    %271 = arith.mulf %270, %269 : vector<1x128xf32>
    %272 = arith.addf %268, %271 : vector<1x128xf32>
    %273 = arith.mulf %14#7, %14#7 : vector<1x128xf32>
    %cst_85 = arith.constant 0.00999999977 : f32
    %274 = vector.broadcast %cst_85 : f32 to vector<1x128xf32>
    %275 = arith.mulf %274, %273 : vector<1x128xf32>
    %276 = arith.addf %272, %275 : vector<1x128xf32>
    %277 = arith.addf %265, %276 : vector<1x128xf32>
    %278 = vector.shape_cast %277 : vector<1x128xf32> to vector<1x1x128xf32>
    %cst_86 = arith.constant dense<0.000000e+00> : vector<1xf32>
    %279 = vector.multi_reduction <add>, %278, %cst_86 [1, 2] : vector<1x1x128xf32> to vector<1xf32>
    %280 = vector.shape_cast %279 : vector<1xf32> to vector<1x1x1xf32>
    %281 = vector.extract %280[0, 0, 0] : f32 from vector<1x1x1xf32>
    %c0_87 = arith.constant 0 : index
    %c0_88 = arith.constant 0 : index
    %282 = memref.load %arg6[%c0_87, %c0_88] : memref<1x1xf32, #tpu.memory_space<smem>>
    memref.store %281, %arg6[%c0_87, %c0_88] : memref<1x1xf32, #tpu.memory_space<smem>>
    %283 = tpu.concatenate %182, %171, %157, %143, %129, %115, %101, %87 in 0 : vector<1x128xf32>, vector<1x128xf32>, vector<1x128xf32>, vector<1x128xf32>, vector<1x128xf32>, vector<1x128xf32>, vector<1x128xf32>, vector<1x128xf32> -> vector<8x128xf32>
    %c0_89 = arith.constant 0 : index
    %c0_90 = arith.constant 0 : index
    %284 = vector.load %arg5[%c0_89, %c0_90] : memref<8x128xf32, #tpu.memory_space<vmem>>, vector<8x128xf32>
    tpu.vector_store %arg5[%c0_89, %c0_90], %283 {strides = array<i32>} : memref<8x128xf32, #tpu.memory_space<vmem>>, vector<8x128xf32>,
    return
  }
}

</mosaic_0001>

<llo_original>
// kernel: tpu_custom_call.1
$region0: #{tpu_custom_call.1}
  #allocation0 [shape = 'u32[]', space=smem, size = 0x4, offset = 0x4, fixed_abs, tag = 'smem constant byte address 0x4 - core index']
  #allocation1 [shape = 'u32[144,128]{1,0:T(1,128)}', space=vmem, size = 0x12000, scoped, tag = 'internal scratch']
  %s0 = inlined_call_operand.hbm [shape: f32[8,128], index: 0, kind: input, shape index: {}]
  %s1 = inlined_call_operand.vmem [shape: f32[1,128], index: 1, kind: input, shape index: {}]
  %s2 = inlined_call_operand.vmem [shape: f32[1,128], index: 2, kind: input, shape index: {}]
  %s3 = inlined_call_operand.vmem [shape: f32[1,128], index: 3, kind: input, shape index: {}]
  %s4 = inlined_call_operand.vmem [shape: f32[1,128], index: 4, kind: input, shape index: {}]
  %s5 = inlined_call_operand.hbm [shape: f32[8,128], index: 5, kind: output, shape index: {0}]
  %s6 = inlined_call_operand.hbm [shape: f32[1,1], index: 6, kind: output, shape index: {1}]
  %7 = xla_tuple %s5, %s6
  %s8 = sld [smem:[#allocation0]]
  $region49: #{tpu_custom_call.1} parent=0
    _
  %s10 = ssub.s32 1, %s8
  %s11 = scalar_select 0, %s10, %s8
  $region1: #{tpu_custom_call.1} parent=0
    #allocation2 [shape = 'u8[4096]{0}', space=vmem, size = 0x1000, scoped, tag = 'input window, operand 0, single buffered']
    #allocation3 [shape = 's32[1]{0}', space=sflag, size = 0x4, scoped, tag = 'scoped memory for tpu_custom_call.1']
    #allocation4 [shape = 's32[1]{0}', space=sflag, size = 0x4, scoped, tag = 'scoped memory for tpu_custom_call.1']
    #allocation5 [shape = 's32[1]{0}', space=sflag, size = 0x4, scoped, tag = 'scoped memory for tpu_custom_call.1']
    #allocation6 [shape = 'u8[4096]{0}', space=vmem, size = 0x1000, scoped, tag = 'output window, operand 0, single buffered']
    #allocation7 [shape = 'u8[512]{0}', space=smem, size = 0x200, scoped, tag = 'output window, operand 1, single buffered']
    %12 = vsyncpa [#allocation3], 0
    %13 = vsyncpa [#allocation4], 0
    %14 = vsyncpa [#allocation5], 0
    // Predicated region
    $region2: #{tpu_custom_call.1} parent=1 // pred_check
      _
    $region3: #{tpu_custom_call.1} parent=1 // pred_check_branch
      %16 = sbr.rel (0) target = $region5
    $region4: #{tpu_custom_call.1} parent=1 // pred_region
      %s18 = ssub.s32 128, 128
      %19 = vsyncadd [#allocation3], %s18
      %s21 = sshll.u32 [#allocation2], 4
      %s22 = int_to_ptr.vmem [resolvable:$true] %s21
      %24 = dma.hbm_to_vmem [thread:$0]  %s0, 128, %s22, [#allocation3]
    $region5: #{tpu_custom_call.1} parent=1 // pred_fallthru
      _
    // Predicated region
    $region6: #{tpu_custom_call.1} parent=1 // pred_check
      _
    $region7: #{tpu_custom_call.1} parent=1 // pred_check_branch
      %26 = sbr.rel (0) target = $region9
    $region8: #{tpu_custom_call.1} parent=1 // pred_region
      _
    $region9: #{tpu_custom_call.1} parent=1 // pred_fallthru
      _
    // Predicated region
    $region10: #{tpu_custom_call.1} parent=1 // pred_check
      _
    $region11: #{tpu_custom_call.1} parent=1 // pred_check_branch
      %28 = sbr.rel (0) target = $region13
    $region12: #{tpu_custom_call.1} parent=1 // pred_region
      _
    $region13: #{tpu_custom_call.1} parent=1 // pred_fallthru
      _
    // Predicated region
    $region14: #{tpu_custom_call.1} parent=1 // pred_check
      _
    $region15: #{tpu_custom_call.1} parent=1 // pred_check_branch
      %30 = sbr.rel (0) target = $region17
    $region16: #{tpu_custom_call.1} parent=1 // pred_region
      _
    $region17: #{tpu_custom_call.1} parent=1 // pred_fallthru
      _
    // Predicated region
    $region18: #{tpu_custom_call.1} parent=1 // pred_check
      _
    $region19: #{tpu_custom_call.1} parent=1 // pred_check_branch
      %32 = sbr.rel (0) target = $region21
    $region20: #{tpu_custom_call.1} parent=1 // pred_region
      _
    $region21: #{tpu_custom_call.1} parent=1 // pred_fallthru
      _
    // Predicated region
    $region22: #{tpu_custom_call.1} parent=1 // pred_check
      _
    $region23: #{tpu_custom_call.1} parent=1 // pred_check_branch
      %34 = sbr.rel (0) target = $region25
    $region24: #{tpu_custom_call.1} parent=1 // pred_region
      %35 = dma.done [#allocation3], 128
    $region25: #{tpu_custom_call.1} parent=1 // pred_fallthru
      _
    %v36 = vld [vmem:[%s1] sm:$0x1]
    %v37 = vld [vmem:[%s2] sm:$0x1]
    %v38 = vld [vmem:[%s3] sm:$0x1]
    %v39 = vld [vmem:[%s4] sm:$0x1]
    %v40 = vld [vmem:[#allocation2] sm:$0xff]
    loop: start=0, step=1, limit=39
    $region26: #{tpu_custom_call.1} parent=1 // loop_pre_header
      _
    $region27: #{tpu_custom_call.1} parent=1 // loop_header
      %s42 = sphi 0, %s46
      %p43 = scmp.ge.s32.totalorder %s42, 39
      %v47 = vphi %v40, %v333
      %v48 = vphi %v40, %v326
      %v49 = vphi %v40, %v311
      %v50 = vphi %v40, %v296
      %v51 = vphi %v40, %v281
      %v52 = vphi %v40, %v266
      %v53 = vphi %v40, %v251
      %v54 = vphi %v40, %v236
    $region28: #{tpu_custom_call.1} parent=1 // loop_header_branch
      %45 = sbr.rel (%p43) target = $region32
    $region29: #{tpu_custom_call.1} parent=1 // loop_body
      %v55 = vmul.f32 %v37, 0.1
      %v56 = vadd.f32 %v36, %v55
      %v57 = vmul.f32 %v47, 0.1
      %v58 = vadd.f32 %v37, %v57
      %v59 = vsub.f32 %v58, %v39
      %v60 = vmul.f32 %v58, 0.1
      %v61 = vadd.f32 %v56, %v60
      %v62 = vmul.f32 %v48, 0.1
      %v65 = vunpack.c.l.s4 1966171168
      %v66 = vunpack.c.0.s8 %v65
      %v67 = vlaneseq
      %v68 = vshrl.u32 %v67, 7
      %v69 = vsub.s32 %v66, %v68
      %v70 = vrot.slane %v62, %v69
      %v71 = vcombine.high %v70, %v70
      %v73 = vunpack.c.l.s4 1966171168
      %v74 = vunpack.c.0.s8 %v73
      %v75 = vlaneseq
      %v76 = vshrl.u32 %v75, 7
      %v77 = vsub.s32 %v74, %v76
      %v78 = vrot.slane %v71, %v77
      %v80 = vadd.f32 %v58, %v78
      %v81 = vsub.f32 %v61, %v38
      %v82 = vsub.f32 %v80, %v39
      %v83 = vmul.f32 %v80, 0.1
      %v84 = vadd.f32 %v61, %v83
      %v85 = vmul.f32 %v49, 0.1
      %v88 = vunpack.c.l.s4 1966171168
      %v89 = vunpack.c.0.s8 %v88
      %v90 = vlaneseq
      %v91 = vshrl.u32 %v90, 7
      %v92 = vsub.s32 %v89, %v91
      %v93 = vrot.slane %v85, %v92
      %v95 = vunpack.c.l.s4 1966171168
      %v96 = vunpack.c.0.s8 %v95
      %v97 = vlaneseq
      %v98 = vshrl.u32 %v97, 7
      %v99 = vsub.s32 %v96, %v98
      %v100 = vrot.slane %v93, %v99
      %v101 = vcombine.high %v100, %v100
      %v103 = vadd.f32 %v80, %v101
      %v104 = vsub.f32 %v84, %v38
      %v105 = vsub.f32 %v103, %v39
      %v106 = vmul.f32 %v103, 0.1
      %v107 = vadd.f32 %v84, %v106
      %v108 = vmul.f32 %v50, 0.1
      %v111 = vunpack.c.l.s4 1966171168
      %v112 = vunpack.c.0.s8 %v111
      %v113 = vlaneseq
      %v114 = vshrl.u32 %v113, 7
      %v115 = vsub.s32 %v112, %v114
      %v116 = vrot.slane %v108, %v115
      %v117 = vcombine.high %v116, %v116
      %v119 = vunpack.c.l.s4 1966171168
      %v120 = vunpack.c.0.s8 %v119
      %v121 = vlaneseq
      %v122 = vshrl.u32 %v121, 7
      %v123 = vsub.s32 %v120, %v122
      %v124 = vrot.slane %v117, %v123
      %v125 = vcombine.high %v124, %v124
      %v127 = vadd.f32 %v103, %v125
      %v128 = vsub.f32 %v107, %v38
      %v129 = vsub.f32 %v127, %v39
      %v130 = vmul.f32 %v127, 0.1
      %v131 = vadd.f32 %v107, %v130
      %v132 = vmul.f32 %v51, 0.1
      %v134 = vcombine.high %v132, %v132
      %v136 = vunpack.c.l.s4 1966171168
      %v137 = vunpack.c.0.s8 %v136
      %v138 = vlaneseq
      %v139 = vshrl.u32 %v138, 7
      %v140 = vsub.s32 %v137, %v139
      %v141 = vrot.slane %v134, %v140
      %v143 = vunpack.c.l.s4 1966171168
      %v144 = vunpack.c.0.s8 %v143
      %v145 = vlaneseq
      %v146 = vshrl.u32 %v145, 7
      %v147 = vsub.s32 %v144, %v146
      %v148 = vrot.slane %v141, %v147
      %v150 = vadd.f32 %v127, %v148
      %v151 = vsub.f32 %v131, %v38
      %v152 = vsub.f32 %v150, %v39
      %v153 = vmul.f32 %v150, 0.1
      %v154 = vadd.f32 %v131, %v153
      %v155 = vmul.f32 %v52, 0.1
      %v157 = vcombine.high %v155, %v155
      %v159 = vunpack.c.l.s4 1966171168
      %v160 = vunpack.c.0.s8 %v159
      %v161 = vlaneseq
      %v162 = vshrl.u32 %v161, 7
      %v163 = vsub.s32 %v160, %v162
      %v164 = vrot.slane %v157, %v163
      %v165 = vcombine.high %v164, %v164
      %v167 = vunpack.c.l.s4 1966171168
      %v168 = vunpack.c.0.s8 %v167
      %v169 = vlaneseq
      %v170 = vshrl.u32 %v169, 7
      %v171 = vsub.s32 %v168, %v170
      %v172 = vrot.slane %v165, %v171
      %v174 = vadd.f32 %v150, %v172
      %v175 = vsub.f32 %v154, %v38
      %v176 = vsub.f32 %v174, %v39
      %v177 = vmul.f32 %v174, 0.1
      %v178 = vadd.f32 %v154, %v177
      %v179 = vmul.f32 %v53, 0.1
      %v181 = vcombine.high %v179, %v179
      %v183 = vunpack.c.l.s4 1966171168
      %v184 = vunpack.c.0.s8 %v183
      %v185 = vlaneseq
      %v186 = vshrl.u32 %v185, 7
      %v187 = vsub.s32 %v184, %v186
      %v188 = vrot.slane %v181, %v187
      %v190 = vunpack.c.l.s4 1966171168
      %v191 = vunpack.c.0.s8 %v190
      %v192 = vlaneseq
      %v193 = vshrl.u32 %v192, 7
      %v194 = vsub.s32 %v191, %v193
      %v195 = vrot.slane %v188, %v194
      %v196 = vcombine.high %v195, %v195
      %v198 = vadd.f32 %v174, %v196
      %v199 = vsub.f32 %v178, %v38
      %v200 = vsub.f32 %v198, %v39
      %v201 = vmul.f32 %v198, 0.1
      %v202 = vadd.f32 %v178, %v201
      %v203 = vmul.f32 %v54, 0.1
      %v205 = vcombine.high %v203, %v203
      %v207 = vunpack.c.l.s4 1966171168
      %v208 = vunpack.c.0.s8 %v207
      %v209 = vlaneseq
      %v210 = vshrl.u32 %v209, 7
      %v211 = vsub.s32 %v208, %v210
      %v212 = vrot.slane %v205, %v211
      %v213 = vcombine.high %v212, %v212
      %v215 = vunpack.c.l.s4 1966171168
      %v216 = vunpack.c.0.s8 %v215
      %v217 = vlaneseq
      %v218 = vshrl.u32 %v217, 7
      %v219 = vsub.s32 %v216, %v218
      %v220 = vrot.slane %v213, %v219
      %v221 = vcombine.high %v220, %v220
      %v223 = vadd.f32 %v198, %v221
      %v224 = vsub.f32 %v202, %v38
      %v225 = vsub.f32 %v223, %v39
      %v226 = vmul.f32 %v224, 0.02
      %v227 = vmul.f32 %v225, 0.002
      %v228 = vmul.f32 %v54, 0.9998
      %v229 = vmul.f32 %v227, 0.1
      %v231 = vlaneseq
      %v232 = vshrl.u32 %v231, 7
      %v233 = vsub.s32 0, %v232
      %v234 = vrot.slane %v229, %v233
      %v236 = vsub.f32 %v228, %v234
      %v237 = vmul.f32 %v226, 0.1
      %v238 = vadd.f32 %v227, %v237
      %v239 = vmul.f32 %v199, 0.02
      %v240 = vadd.f32 %v226, %v239
      %v241 = vmul.f32 %v200, 0.002
      %v242 = vadd.f32 %v238, %v241
      %v243 = vmul.f32 %v53, 0.9998
      %v244 = vmul.f32 %v242, 0.1
      %v246 = vlaneseq
      %v247 = vshrl.u32 %v246, 7
      %v248 = vsub.s32 0, %v247
      %v249 = vrot.slane %v244, %v248
      %v251 = vsub.f32 %v243, %v249
      %v252 = vmul.f32 %v240, 0.1
      %v253 = vadd.f32 %v242, %v252
      %v254 = vmul.f32 %v175, 0.02
      %v255 = vadd.f32 %v240, %v254
      %v256 = vmul.f32 %v176, 0.002
      %v257 = vadd.f32 %v253, %v256
      %v258 = vmul.f32 %v52, 0.9998
      %v259 = vmul.f32 %v257, 0.1
      %v261 = vlaneseq
      %v262 = vshrl.u32 %v261, 7
      %v263 = vsub.s32 0, %v262
      %v264 = vrot.slane %v259, %v263
      %v266 = vsub.f32 %v258, %v264
      %v267 = vmul.f32 %v255, 0.1
      %v268 = vadd.f32 %v257, %v267
      %v269 = vmul.f32 %v151, 0.02
      %v270 = vadd.f32 %v255, %v269
      %v271 = vmul.f32 %v152, 0.002
      %v272 = vadd.f32 %v268, %v271
      %v273 = vmul.f32 %v51, 0.9998
      %v274 = vmul.f32 %v272, 0.1
      %v276 = vlaneseq
      %v277 = vshrl.u32 %v276, 7
      %v278 = vsub.s32 0, %v277
      %v279 = vrot.slane %v274, %v278
      %v281 = vsub.f32 %v273, %v279
      %v282 = vmul.f32 %v270, 0.1
      %v283 = vadd.f32 %v272, %v282
      %v284 = vmul.f32 %v128, 0.02
      %v285 = vadd.f32 %v270, %v284
      %v286 = vmul.f32 %v129, 0.002
      %v287 = vadd.f32 %v283, %v286
      %v288 = vmul.f32 %v50, 0.9998
      %v289 = vmul.f32 %v287, 0.1
      %v291 = vlaneseq
      %v292 = vshrl.u32 %v291, 7
      %v293 = vsub.s32 0, %v292
      %v294 = vrot.slane %v289, %v293
      %v296 = vsub.f32 %v288, %v294
      %v297 = vmul.f32 %v285, 0.1
      %v298 = vadd.f32 %v287, %v297
      %v299 = vmul.f32 %v104, 0.02
      %v300 = vadd.f32 %v285, %v299
      %v301 = vmul.f32 %v105, 0.002
      %v302 = vadd.f32 %v298, %v301
      %v303 = vmul.f32 %v49, 0.9998
      %v304 = vmul.f32 %v302, 0.1
      %v306 = vlaneseq
      %v307 = vshrl.u32 %v306, 7
      %v308 = vsub.s32 0, %v307
      %v309 = vrot.slane %v304, %v308
      %v311 = vsub.f32 %v303, %v309
      %v312 = vmul.f32 %v300, 0.1
      %v313 = vadd.f32 %v302, %v312
      %v314 = vmul.f32 %v81, 0.02
      %v315 = vadd.f32 %v300, %v314
      %v316 = vmul.f32 %v82, 0.002
      %v317 = vadd.f32 %v313, %v316
      %v318 = vmul.f32 %v48, 0.9998
      %v319 = vmul.f32 %v317, 0.1
      %v321 = vlaneseq
      %v322 = vshrl.u32 %v321, 7
      %v323 = vsub.s32 0, %v322
      %v324 = vrot.slane %v319, %v323
      %v326 = vsub.f32 %v318, %v324
      %v327 = vmul.f32 %v315, 0.1
      %v328 = vadd.f32 %v317, %v327
      %v329 = vmul.f32 %v59, 0.002
      %v330 = vadd.f32 %v328, %v329
      %v331 = vmul.f32 %v47, 0.9998
      %v332 = vmul.f32 %v330, 0.1
      %v333 = vsub.f32 %v331, %v332
    $region30: #{tpu_custom_call.1} parent=1 // loop_footer
      %s46 = sadd.s32 1, %s42
    $region31: #{tpu_custom_call.1} parent=1 // loop_footer_branch
      %41 = sbr.rel target = $region27
    $region32: #{tpu_custom_call.1} parent=1 // loop_exit
      _
    %v334 = vmul.f32 %v37, 0.1
    %v335 = vadd.f32 %v36, %v334
    %v336 = vmul.f32 %v47, 0.1
    %v337 = vadd.f32 %v37, %v336
    %v338 = vsub.f32 %v335, %v38
    %v339 = vsub.f32 %v337, %v39
    %v340 = vmul.f32 %v337, 0.1
    %v341 = vadd.f32 %v335, %v340
    %v342 = vmul.f32 %v48, 0.1
    %v345 = vunpack.c.l.s4 1966171168
    %v346 = vunpack.c.0.s8 %v345
    %v347 = vlaneseq
    %v348 = vshrl.u32 %v347, 7
    %v349 = vsub.s32 %v346, %v348
    %v350 = vrot.slane %v342, %v349
    %v351 = vcombine.high %v350, %v350
    %v353 = vunpack.c.l.s4 1966171168
    %v354 = vunpack.c.0.s8 %v353
    %v355 = vlaneseq
    %v356 = vshrl.u32 %v355, 7
    %v357 = vsub.s32 %v354, %v356
    %v358 = vrot.slane %v351, %v357
    %v360 = vadd.f32 %v337, %v358
    %v361 = vsub.f32 %v341, %v38
    %v362 = vsub.f32 %v360, %v39
    %v363 = vmul.f32 %v360, 0.1
    %v364 = vadd.f32 %v341, %v363
    %v365 = vmul.f32 %v49, 0.1
    %v368 = vunpack.c.l.s4 1966171168
    %v369 = vunpack.c.0.s8 %v368
    %v370 = vlaneseq
    %v371 = vshrl.u32 %v370, 7
    %v372 = vsub.s32 %v369, %v371
    %v373 = vrot.slane %v365, %v372
    %v375 = vunpack.c.l.s4 1966171168
    %v376 = vunpack.c.0.s8 %v375
    %v377 = vlaneseq
    %v378 = vshrl.u32 %v377, 7
    %v379 = vsub.s32 %v376, %v378
    %v380 = vrot.slane %v373, %v379
    %v381 = vcombine.high %v380, %v380
    %v383 = vadd.f32 %v360, %v381
    %v384 = vsub.f32 %v364, %v38
    %v385 = vsub.f32 %v383, %v39
    %v386 = vmul.f32 %v383, 0.1
    %v387 = vadd.f32 %v364, %v386
    %v388 = vmul.f32 %v50, 0.1
    %v391 = vunpack.c.l.s4 1966171168
    %v392 = vunpack.c.0.s8 %v391
    %v393 = vlaneseq
    %v394 = vshrl.u32 %v393, 7
    %v395 = vsub.s32 %v392, %v394
    %v396 = vrot.slane %v388, %v395
    %v397 = vcombine.high %v396, %v396
    %v399 = vunpack.c.l.s4 1966171168
    %v400 = vunpack.c.0.s8 %v399
    %v401 = vlaneseq
    %v402 = vshrl.u32 %v401, 7
    %v403 = vsub.s32 %v400, %v402
    %v404 = vrot.slane %v397, %v403
    %v405 = vcombine.high %v404, %v404
    %v407 = vadd.f32 %v383, %v405
    %v408 = vsub.f32 %v387, %v38
    %v409 = vsub.f32 %v407, %v39
    %v410 = vmul.f32 %v407, 0.1
    %v411 = vadd.f32 %v387, %v410
    %v412 = vmul.f32 %v51, 0.1
    %v414 = vcombine.high %v412, %v412
    %v416 = vunpack.c.l.s4 1966171168
    %v417 = vunpack.c.0.s8 %v416
    %v418 = vlaneseq
    %v419 = vshrl.u32 %v418, 7
    %v420 = vsub.s32 %v417, %v419
    %v421 = vrot.slane %v414, %v420
    %v423 = vunpack.c.l.s4 1966171168
    %v424 = vunpack.c.0.s8 %v423
    %v425 = vlaneseq
    %v426 = vshrl.u32 %v425, 7
    %v427 = vsub.s32 %v424, %v426
    %v428 = vrot.slane %v421, %v427
    %v430 = vadd.f32 %v407, %v428
    %v431 = vsub.f32 %v411, %v38
    %v432 = vsub.f32 %v430, %v39
    %v433 = vmul.f32 %v430, 0.1
    %v434 = vadd.f32 %v411, %v433
    %v435 = vmul.f32 %v52, 0.1
    %v437 = vcombine.high %v435, %v435
    %v439 = vunpack.c.l.s4 1966171168
    %v440 = vunpack.c.0.s8 %v439
    %v441 = vlaneseq
    %v442 = vshrl.u32 %v441, 7
    %v443 = vsub.s32 %v440, %v442
    %v444 = vrot.slane %v437, %v443
    %v445 = vcombine.high %v444, %v444
    %v447 = vunpack.c.l.s4 1966171168
    %v448 = vunpack.c.0.s8 %v447
    %v449 = vlaneseq
    %v450 = vshrl.u32 %v449, 7
    %v451 = vsub.s32 %v448, %v450
    %v452 = vrot.slane %v445, %v451
    %v454 = vadd.f32 %v430, %v452
    %v455 = vsub.f32 %v434, %v38
    %v456 = vsub.f32 %v454, %v39
    %v457 = vmul.f32 %v454, 0.1
    %v458 = vadd.f32 %v434, %v457
    %v459 = vmul.f32 %v53, 0.1
    %v461 = vcombine.high %v459, %v459
    %v463 = vunpack.c.l.s4 1966171168
    %v464 = vunpack.c.0.s8 %v463
    %v465 = vlaneseq
    %v466 = vshrl.u32 %v465, 7
    %v467 = vsub.s32 %v464, %v466
    %v468 = vrot.slane %v461, %v467
    %v470 = vunpack.c.l.s4 1966171168
    %v471 = vunpack.c.0.s8 %v470
    %v472 = vlaneseq
    %v473 = vshrl.u32 %v472, 7
    %v474 = vsub.s32 %v471, %v473
    %v475 = vrot.slane %v468, %v474
    %v476 = vcombine.high %v475, %v475
    %v478 = vadd.f32 %v454, %v476
    %v479 = vsub.f32 %v458, %v38
    %v480 = vsub.f32 %v478, %v39
    %v481 = vmul.f32 %v478, 0.1
    %v482 = vadd.f32 %v458, %v481
    %v483 = vmul.f32 %v54, 0.1
    %v485 = vcombine.high %v483, %v483
    %v487 = vunpack.c.l.s4 1966171168
    %v488 = vunpack.c.0.s8 %v487
    %v489 = vlaneseq
    %v490 = vshrl.u32 %v489, 7
    %v491 = vsub.s32 %v488, %v490
    %v492 = vrot.slane %v485, %v491
    %v493 = vcombine.high %v492, %v492
    %v495 = vunpack.c.l.s4 1966171168
    %v496 = vunpack.c.0.s8 %v495
    %v497 = vlaneseq
    %v498 = vshrl.u32 %v497, 7
    %v499 = vsub.s32 %v496, %v498
    %v500 = vrot.slane %v493, %v499
    %v501 = vcombine.high %v500, %v500
    %v503 = vadd.f32 %v478, %v501
    %v504 = vsub.f32 %v482, %v38
    %v505 = vsub.f32 %v503, %v39
    %v506 = vmul.f32 %v504, 0.02
    %v507 = vmul.f32 %v505, 0.002
    %v508 = vmul.f32 %v54, 0.9998
    %v509 = vmul.f32 %v507, 0.1
    %v511 = vlaneseq
    %v512 = vshrl.u32 %v511, 7
    %v513 = vsub.s32 0, %v512
    %v514 = vrot.slane %v509, %v513
    %v516 = vsub.f32 %v508, %v514
    %v517 = vmul.f32 %v506, 0.1
    %v518 = vadd.f32 %v507, %v517
    %v519 = vmul.f32 %v479, 0.02
    %v520 = vadd.f32 %v506, %v519
    %v521 = vmul.f32 %v480, 0.002
    %v522 = vadd.f32 %v518, %v521
    %v523 = vmul.f32 %v53, 0.9998
    %v524 = vmul.f32 %v522, 0.1
    %v526 = vlaneseq
    %v527 = vshrl.u32 %v526, 7
    %v528 = vsub.s32 0, %v527
    %v529 = vrot.slane %v524, %v528
    %v531 = vsub.f32 %v523, %v529
    %v532 = vmul.f32 %v520, 0.1
    %v533 = vadd.f32 %v522, %v532
    %v534 = vmul.f32 %v455, 0.02
    %v535 = vadd.f32 %v520, %v534
    %v536 = vmul.f32 %v456, 0.002
    %v537 = vadd.f32 %v533, %v536
    %v538 = vmul.f32 %v52, 0.9998
    %v539 = vmul.f32 %v537, 0.1
    %v541 = vlaneseq
    %v542 = vshrl.u32 %v541, 7
    %v543 = vsub.s32 0, %v542
    %v544 = vrot.slane %v539, %v543
    %v546 = vsub.f32 %v538, %v544
    %v547 = vmul.f32 %v535, 0.1
    %v548 = vadd.f32 %v537, %v547
    %v549 = vmul.f32 %v431, 0.02
    %v550 = vadd.f32 %v535, %v549
    %v551 = vmul.f32 %v432, 0.002
    %v552 = vadd.f32 %v548, %v551
    %v553 = vmul.f32 %v51, 0.9998
    %v554 = vmul.f32 %v552, 0.1
    %v556 = vlaneseq
    %v557 = vshrl.u32 %v556, 7
    %v558 = vsub.s32 0, %v557
    %v559 = vrot.slane %v554, %v558
    %v561 = vsub.f32 %v553, %v559
    %v562 = vmul.f32 %v550, 0.1
    %v563 = vadd.f32 %v552, %v562
    %v564 = vmul.f32 %v408, 0.02
    %v565 = vadd.f32 %v550, %v564
    %v566 = vmul.f32 %v409, 0.002
    %v567 = vadd.f32 %v563, %v566
    %v568 = vmul.f32 %v50, 0.9998
    %v569 = vmul.f32 %v567, 0.1
    %v571 = vlaneseq
    %v572 = vshrl.u32 %v571, 7
    %v573 = vsub.s32 0, %v572
    %v574 = vrot.slane %v569, %v573
    %v576 = vsub.f32 %v568, %v574
    %v577 = vmul.f32 %v565, 0.1
    %v578 = vadd.f32 %v567, %v577
    %v579 = vmul.f32 %v384, 0.02
    %v580 = vadd.f32 %v565, %v579
    %v581 = vmul.f32 %v385, 0.002
    %v582 = vadd.f32 %v578, %v581
    %v583 = vmul.f32 %v49, 0.9998
    %v584 = vmul.f32 %v582, 0.1
    %v586 = vlaneseq
    %v587 = vshrl.u32 %v586, 7
    %v588 = vsub.s32 0, %v587
    %v589 = vrot.slane %v584, %v588
    %v591 = vsub.f32 %v583, %v589
    %v592 = vmul.f32 %v580, 0.1
    %v593 = vadd.f32 %v582, %v592
    %v594 = vmul.f32 %v361, 0.02
    %v595 = vadd.f32 %v580, %v594
    %v596 = vmul.f32 %v362, 0.002
    %v597 = vadd.f32 %v593, %v596
    %v598 = vmul.f32 %v48, 0.9998
    %v599 = vmul.f32 %v597, 0.1
    %v601 = vlaneseq
    %v602 = vshrl.u32 %v601, 7
    %v603 = vsub.s32 0, %v602
    %v604 = vrot.slane %v599, %v603
    %v606 = vsub.f32 %v598, %v604
    %v607 = vmul.f32 %v595, 0.1
    %v608 = vadd.f32 %v597, %v607
    %v609 = vmul.f32 %v339, 0.002
    %v610 = vadd.f32 %v608, %v609
    %v611 = vmul.f32 %v47, 0.9998
    %v612 = vmul.f32 %v610, 0.1
    %v613 = vsub.f32 %v611, %v612
    %v614 = vmul.f32 %v338, %v338
    %v615 = vmul.f32 %v339, %v339
    %v616 = vmul.f32 %v615, 0.1
    %v617 = vadd.f32 %v614, %v616
    %v618 = vmul.f32 %v47, %v47
    %v619 = vmul.f32 %v618, 0.01
    %v620 = vadd.f32 %v617, %v619
    %v621 = vmul.f32 %v361, %v361
    %v622 = vmul.f32 %v362, %v362
    %v623 = vmul.f32 %v622, 0.1
    %v624 = vadd.f32 %v621, %v623
    %v625 = vmul.f32 %v48, %v48
    %v626 = vmul.f32 %v625, 0.01
    %v629 = vunpack.c.l.s4 1966171168
    %v630 = vunpack.c.0.s8 %v629
    %v631 = vlaneseq
    %v632 = vshrl.u32 %v631, 7
    %v633 = vsub.s32 %v630, %v632
    %v634 = vrot.slane %v626, %v633
    %v635 = vcombine.high %v634, %v634
    %v637 = vunpack.c.l.s4 1966171168
    %v638 = vunpack.c.0.s8 %v637
    %v639 = vlaneseq
    %v640 = vshrl.u32 %v639, 7
    %v641 = vsub.s32 %v638, %v640
    %v642 = vrot.slane %v635, %v641
    %v644 = vadd.f32 %v624, %v642
    %v645 = vadd.f32 %v620, %v644
    %v646 = vmul.f32 %v384, %v384
    %v647 = vmul.f32 %v385, %v385
    %v648 = vmul.f32 %v647, 0.1
    %v649 = vadd.f32 %v646, %v648
    %v650 = vmul.f32 %v49, %v49
    %v651 = vmul.f32 %v650, 0.01
    %v654 = vunpack.c.l.s4 1966171168
    %v655 = vunpack.c.0.s8 %v654
    %v656 = vlaneseq
    %v657 = vshrl.u32 %v656, 7
    %v658 = vsub.s32 %v655, %v657
    %v659 = vrot.slane %v651, %v658
    %v661 = vunpack.c.l.s4 1966171168
    %v662 = vunpack.c.0.s8 %v661
    %v663 = vlaneseq
    %v664 = vshrl.u32 %v663, 7
    %v665 = vsub.s32 %v662, %v664
    %v666 = vrot.slane %v659, %v665
    %v667 = vcombine.high %v666, %v666
    %v669 = vadd.f32 %v649, %v667
    %v670 = vadd.f32 %v645, %v669
    %v671 = vmul.f32 %v408, %v408
    %v672 = vmul.f32 %v409, %v409
    %v673 = vmul.f32 %v672, 0.1
    %v674 = vadd.f32 %v671, %v673
    %v675 = vmul.f32 %v50, %v50
    %v676 = vmul.f32 %v675, 0.01
    %v679 = vunpack.c.l.s4 1966171168
    %v680 = vunpack.c.0.s8 %v679
    %v681 = vlaneseq
    %v682 = vshrl.u32 %v681, 7
    %v683 = vsub.s32 %v680, %v682
    %v684 = vrot.slane %v676, %v683
    %v685 = vcombine.high %v684, %v684
    %v687 = vunpack.c.l.s4 1966171168
    %v688 = vunpack.c.0.s8 %v687
    %v689 = vlaneseq
    %v690 = vshrl.u32 %v689, 7
    %v691 = vsub.s32 %v688, %v690
    %v692 = vrot.slane %v685, %v691
    %v693 = vcombine.high %v692, %v692
    %v695 = vadd.f32 %v674, %v693
    %v696 = vadd.f32 %v670, %v695
    %v697 = vmul.f32 %v431, %v431
    %v698 = vmul.f32 %v432, %v432
    %v699 = vmul.f32 %v698, 0.1
    %v700 = vadd.f32 %v697, %v699
    %v701 = vmul.f32 %v51, %v51
    %v702 = vmul.f32 %v701, 0.01
    %v704 = vcombine.high %v702, %v702
    %v706 = vunpack.c.l.s4 1966171168
    %v707 = vunpack.c.0.s8 %v706
    %v708 = vlaneseq
    %v709 = vshrl.u32 %v708, 7
    %v710 = vsub.s32 %v707, %v709
    %v711 = vrot.slane %v704, %v710
    %v713 = vunpack.c.l.s4 1966171168
    %v714 = vunpack.c.0.s8 %v713
    %v715 = vlaneseq
    %v716 = vshrl.u32 %v715, 7
    %v717 = vsub.s32 %v714, %v716
    %v718 = vrot.slane %v711, %v717
    %v720 = vadd.f32 %v700, %v718
    %v721 = vadd.f32 %v696, %v720
    %v722 = vmul.f32 %v455, %v455
    %v723 = vmul.f32 %v456, %v456
    %v724 = vmul.f32 %v723, 0.1
    %v725 = vadd.f32 %v722, %v724
    %v726 = vmul.f32 %v52, %v52
    %v727 = vmul.f32 %v726, 0.01
    %v729 = vcombine.high %v727, %v727
    %v731 = vunpack.c.l.s4 1966171168
    %v732 = vunpack.c.0.s8 %v731
    %v733 = vlaneseq
    %v734 = vshrl.u32 %v733, 7
    %v735 = vsub.s32 %v732, %v734
    %v736 = vrot.slane %v729, %v735
    %v737 = vcombine.high %v736, %v736
    %v739 = vunpack.c.l.s4 1966171168
    %v740 = vunpack.c.0.s8 %v739
    %v741 = vlaneseq
    %v742 = vshrl.u32 %v741, 7
    %v743 = vsub.s32 %v740, %v742
    %v744 = vrot.slane %v737, %v743
    %v746 = vadd.f32 %v725, %v744
    %v747 = vadd.f32 %v721, %v746
    %v748 = vmul.f32 %v479, %v479
    %v749 = vmul.f32 %v480, %v480
    %v750 = vmul.f32 %v749, 0.1
    %v751 = vadd.f32 %v748, %v750
    %v752 = vmul.f32 %v53, %v53
    %v753 = vmul.f32 %v752, 0.01
    %v755 = vcombine.high %v753, %v753
    %v757 = vunpack.c.l.s4 1966171168
    %v758 = vunpack.c.0.s8 %v757
    %v759 = vlaneseq
    %v760 = vshrl.u32 %v759, 7
    %v761 = vsub.s32 %v758, %v760
    %v762 = vrot.slane %v755, %v761
    %v764 = vunpack.c.l.s4 1966171168
    %v765 = vunpack.c.0.s8 %v764
    %v766 = vlaneseq
    %v767 = vshrl.u32 %v766, 7
    %v768 = vsub.s32 %v765, %v767
    %v769 = vrot.slane %v762, %v768
    %v770 = vcombine.high %v769, %v769
    %v772 = vadd.f32 %v751, %v770
    %v773 = vadd.f32 %v747, %v772
    %v774 = vmul.f32 %v504, %v504
    %v775 = vmul.f32 %v505, %v505
    %v776 = vmul.f32 %v775, 0.1
    %v777 = vadd.f32 %v774, %v776
    %v778 = vmul.f32 %v54, %v54
    %v779 = vmul.f32 %v778, 0.01
    %v781 = vcombine.high %v779, %v779
    %v783 = vunpack.c.l.s4 1966171168
    %v784 = vunpack.c.0.s8 %v783
    %v785 = vlaneseq
    %v786 = vshrl.u32 %v785, 7
    %v787 = vsub.s32 %v784, %v786
    %v788 = vrot.slane %v781, %v787
    %v789 = vcombine.high %v788, %v788
    %v791 = vunpack.c.l.s4 1966171168
    %v792 = vunpack.c.0.s8 %v791
    %v793 = vlaneseq
    %v794 = vshrl.u32 %v793, 7
    %v795 = vsub.s32 %v792, %v794
    %v796 = vrot.slane %v789, %v795
    %v797 = vcombine.high %v796, %v796
    %v799 = vadd.f32 %v777, %v797
    %v800 = vadd.f32 %v773, %v799
    %vm801 = vcmask 1040384
    %v802 = vsel %vm801, %v800, 0.0
    %803 = vadd.xlane.f32.xlu0 %v802
    %v804 = vpop.xlane.xlu0 %803
    %v805 = vrot.slane %v804, 4
    %v806 = vadd.f32 %v804, %v805
    %v807 = vrot.slane %v806, 2
    %v808 = vadd.f32 %v806, %v807
    %v809 = vrot.slane %v808, 1
    %v810 = vadd.f32 %v808, %v809
    %s811 = vtos %v810
    %s812 = scalar_lea.smem [#allocation7], 0
    %813 = sst [smem:[%s812]] %s811
    %v814 = vsel %vm801, %v613, %v606
    %vm815 = vcmask 1041408
    %v816 = vsel %vm815, %v814, %v591
    %vm817 = vcmask 1042432
    %v818 = vsel %vm817, %v816, %v576
    %vm819 = vcmask 1043456
    %v820 = vsel %vm819, %v818, %v561
    %vm821 = vcmask 1044480
    %v822 = vsel %vm821, %v820, %v546
    %vm823 = vcmask 1045504
    %v824 = vsel %vm823, %v822, %v531
    %vm825 = vcmask 1046528
    %v826 = vsel %vm825, %v824, %v516
    %827 = vst [vmem:[#allocation6] sm:$0xff] %v826
    // Predicated region
    $region33: #{tpu_custom_call.1} parent=1 // pred_check
      _
    $region34: #{tpu_custom_call.1} parent=1 // pred_check_branch
      %829 = sbr.rel (0) target = $region36
    $region35: #{tpu_custom_call.1} parent=1 // pred_region
      %s831 = ssub.s32 128, 128
      %832 = vsyncadd [#allocation4], %s831
      %s834 = sshll.u32 [#allocation6], 4
      %s835 = int_to_ptr.vmem [resolvable:$true] %s834
      %837 = dma.vmem_to_hbm [thread:$0]  %s835, 128, %s5, [#allocation4]
    $region36: #{tpu_custom_call.1} parent=1 // pred_fallthru
      _
    // Predicated region
    $region37: #{tpu_custom_call.1} parent=1 // pred_check
      _
    $region38: #{tpu_custom_call.1} parent=1 // pred_check_branch
      %839 = sbr.rel (0) target = $region40
    $region39: #{tpu_custom_call.1} parent=1 // pred_region
      %s841 = ssub.s32 16, 16
      %842 = vsyncadd [#allocation5], %s841
      %845 = dma.smem_to_hbm [#allocation7], 16, %s6, [#allocation5]
    $region40: #{tpu_custom_call.1} parent=1 // pred_fallthru
      _
    // Predicated region
    $region41: #{tpu_custom_call.1} parent=1 // pred_check
      _
    $region42: #{tpu_custom_call.1} parent=1 // pred_check_branch
      %847 = sbr.rel (0) target = $region44
    $region43: #{tpu_custom_call.1} parent=1 // pred_region
      %848 = dma.done [#allocation4], 128
    $region44: #{tpu_custom_call.1} parent=1 // pred_fallthru
      _
    // Predicated region
    $region45: #{tpu_custom_call.1} parent=1 // pred_check
      _
    $region46: #{tpu_custom_call.1} parent=1 // pred_check_branch
      %850 = sbr.rel (0) target = $region48
    $region47: #{tpu_custom_call.1} parent=1 // pred_region
      %851 = dma.done [#allocation5], 16
    $region48: #{tpu_custom_call.1} parent=1 // pred_fallthru
      _
    %852 = sfence
    %853 = vsyncpa [#allocation3], 1
    %854 = vsyncpa [#allocation4], 1
    %855 = vsyncpa [#allocation5], 1

</llo_original>
